<compile_context>
chip_gen: v5e
topology: v5e:2x2
jax: 0.10.0
libtpu: 0.0.40
codegen_flags: <defaults>
</compile_context>

<pallas_src>
import functools

import jax
import jax.numpy as jnp
from jax import lax
from jax.experimental import pallas as pl
from jax.experimental.pallas import tpu as pltpu

_LANES = 128
_SUBLANES = 8


def _flood_bce_kernel(x_ref, y_ref, o_ref, *, steps_per_split, last_block,
                      valid_in_last, tile_rows, partial_last, has_surplus):
    c = pl.program_id(0)            # core-split index ("parallel")
    i = pl.program_id(1)            # row-block index within this split ("arbitrary")
    g = c * steps_per_split + i     # global row-block index

    @pl.when(i == 0)
    def _():
        o_ref[...] = jnp.zeros_like(o_ref)

    x = x_ref[...].astype(jnp.float32)
    y = y_ref[...].astype(jnp.float32)
    # Numerically stable BCE-with-logits (matches torch.nn.BCEWithLogitsLoss).
    elem = jnp.maximum(x, 0.0) - x * y + jnp.log1p(jnp.exp(-jnp.abs(x)))

    def accumulate(e):
        # vreg-tree partial reduction (tile_rows,128)->(8,128): pure VPU adds,
        # no per-step cross-lane work, single 8-vreg accumulate/store.
        o_ref[...] += e.reshape(tile_rows // _SUBLANES, _SUBLANES, _LANES).sum(axis=0)

    if partial_last or has_surplus:
        @pl.when(g < last_block)
        def _():
            accumulate(elem)

        @pl.when(g == last_block)
        def _():
            if partial_last:
                # Tile-local flat index (< tile_rows*128, fits int32) compared
                # against the number of valid elements in the last real block.
                # Masks both the <128-lane pad and any out-of-bounds rows of a
                # partial block (whose contents are undefined, possibly NaN).
                row = lax.broadcasted_iota(jnp.int32, elem.shape, 0)
                col = lax.broadcasted_iota(jnp.int32, elem.shape, 1)
                local = row * _LANES + col
                accumulate(jnp.where(local < valid_in_last, elem, 0.0))
            else:
                accumulate(elem)
        # g > last_block: surplus step of an uneven core split -> contributes nothing.
    else:
        accumulate(elem)


def flooding_bce_with_logits_loss(logits, targets, b=0.01, tile_rows=None):
    assert logits.shape == targets.shape
    n = int(logits.size)
    assert n > 0, "FloodingBCEWithLogitsLoss needs at least one element"

    def to_slab(a):
        flat = a.reshape(-1)                       # free for contiguous arrays
        rem = n % _LANES
        if rem:
            # TODO(synk): a fully copy-free path for n % 128 != 0 needs manual
            # DMA from a 1-D HBM ref; here we pad only to the next 128 lanes.
            flat = jnp.pad(flat, (0, _LANES - rem))
        return flat.reshape(-1, _LANES)

    x = to_slab(logits)
    y = to_slab(targets)
    rows = x.shape[0]                              # == cdiv(n, 128)

    if tile_rows is None:
        # Lane-dense tiles up to 2048x128 (1 MiB f32 per input buffer) to
        # amortize per-grid-step overhead; small inputs fit one tile.
        tile_rows = max(_SUBLANES, min(2048, pl.cdiv(rows, _SUBLANES) * _SUBLANES))
    assert tile_rows % _SUBLANES == 0, "tile_rows must be a multiple of 8"

    chunk = tile_rows * _LANES
    total_blocks = pl.cdiv(rows, tile_rows)
    n_split = 2 if total_blocks >= 2 else 1        # v7x: one row range per TC
    steps_per_split = pl.cdiv(total_blocks, n_split)
    last_block = total_blocks - 1
    valid_in_last = n - last_block * chunk         # python int in [1, chunk]
    partial_last = valid_in_last < chunk
    has_surplus = n_split * steps_per_split > total_blocks

    def in_map(c, i):
        # Clamp surplus steps of an uneven split onto the last real block so
        # their DMAs stay in-bounds; their contribution is gated off in-kernel.
        return (jnp.minimum(c * steps_per_split + i, last_block), 0)

    kernel = functools.partial(
        _flood_bce_kernel, steps_per_split=steps_per_split,
        last_block=last_block, valid_in_last=valid_in_last,
        tile_rows=tile_rows, partial_last=partial_last, has_surplus=has_surplus)

    # VMEM: 2 pipeline buffers per input + resident (8,128) output block(s).
    in_bytes = jnp.dtype(x.dtype).itemsize + jnp.dtype(y.dtype).itemsize
    need = 2 * chunk * in_bytes + 2 * n_split * _SUBLANES * _LANES * 4
    vmem_limit = int(min(32 << 20, max(8 << 20, need + (4 << 20))))

    psum = pl.pallas_call(
        kernel,
        out_shape=jax.ShapeDtypeStruct((n_split * _SUBLANES, _LANES), jnp.float32),
        grid_spec=pltpu.PrefetchScalarGridSpec(
            num_scalar_prefetch=0,
            grid=(n_split, steps_per_split),
            in_specs=[
                pl.BlockSpec((tile_rows, _LANES), in_map),
                pl.BlockSpec((tile_rows, _LANES), in_map),
            ],
            out_specs=pl.BlockSpec((_SUBLANES, _LANES), lambda c, i: (c, 0)),
        ),
        compiler_params=pltpu.CompilerParams(
            dimension_semantics=("parallel", "arbitrary"),
            vmem_limit_bytes=vmem_limit,
        ),
    )(x, y)

    # Final reduction + mean + flooding transform (trivial scalar-level work).
    mean = jnp.sum(psum) / jnp.float32(n)
    return jnp.abs(mean - jnp.float32(b)) + jnp.float32(b)


def _reference(logits, targets, b=0.01):
    x = logits.astype(jnp.float32)
    y = targets.astype(jnp.float32)
    elem = jnp.maximum(x, 0.0) - x * y + jnp.log1p(jnp.exp(-jnp.abs(x)))
    bce = jnp.mean(elem)
    return jnp.abs(bce - b) + b


if __name__ == "__main__":
    key = jax.random.PRNGKey(0)
    k1, k2, k3, k4, k5, k6 = jax.random.split(key, 6)

    # 1) NCHW segmentation-style inputs, default tiling (single grid step).
    logits = jax.random.normal(k1, (2, 4, 16, 16), dtype=jnp.float32)
    targets = jax.random.bernoulli(k2, 0.5, (2, 4, 16, 16)).astype(jnp.float32)
    out = jax.block_until_ready(flooding_bce_with_logits_loss(logits, targets, b=0.01))
    ref = _reference(logits, targets, b=0.01)
    assert jnp.allclose(out, ref, atol=1e-5, rtol=1e-5), (out, ref)

    # 2) Same inputs, small explicit tile -> 2-way core split, one block each.
    out2 = jax.block_until_ready(
        flooding_bce_with_logits_loss(logits, targets, b=0.01, tile_rows=8))
    assert jnp.allclose(out2, ref, atol=1e-5, rtol=1e-5), (out2, ref)

    # 3) Ragged element count (not a multiple of 128) -> gated in-kernel mask.
    logits3 = jax.random.normal(k3, (2, 3, 7, 5), dtype=jnp.float32)
    targets3 = jax.random.bernoulli(k4, 0.5, (2, 3, 7, 5)).astype(jnp.float32)
    out3 = jax.block_until_ready(flooding_bce_with_logits_loss(logits3, targets3, b=0.01))
    ref3 = _reference(logits3, targets3, b=0.01)
    assert jnp.allclose(out3, ref3, atol=1e-5, rtol=1e-5), (out3, ref3)

    # 4) Odd number of row-blocks + partial last block + uneven 2-way split
    #    (exercises the surplus-step gating and the clamped index_map).
    logits4 = jax.random.normal(k5, (4, 587), dtype=jnp.float32)
    targets4 = jax.random.bernoulli(k6, 0.5, (4, 587)).astype(jnp.float32)
    out4 = jax.block_until_ready(
        flooding_bce_with_logits_loss(logits4, targets4, b=0.01, tile_rows=8))
    ref4 = _reference(logits4, targets4, b=0.01)
    assert jnp.allclose(out4, ref4, atol=1e-5, rtol=1e-5), (out4, ref4)

    print("KERNEL_OK")
</pallas_src>

<mosaic_0001>
module attributes {stable_mosaic.version = 11 : i64} {
  func.func @_flood_bce_kernel(%arg0: i32, %arg1: i32, %arg2: memref<16x128xf32, #tpu.memory_space<vmem>>, %arg3: memref<16x128xf32, #tpu.memory_space<vmem>>, %arg4: memref<8x128xf32, #tpu.memory_space<vmem>>) attributes {dimension_semantics = [#tpu.dimension_semantics<parallel>, #tpu.dimension_semantics<arbitrary>], iteration_bounds = array<i64: 1, 1>, scalar_prefetch = 0 : i64, scratch_operands = 0 : i64, tpu.core_type = #tpu.core_type<tc>, window_params = [{transform_indices = @transform_0, window_bounds = array<i64: 16, 128>}, {transform_indices = @transform_1, window_bounds = array<i64: 16, 128>}, {transform_indices = @transform_2, window_bounds = array<i64: 8, 128>}]} {
    %c0_i32 = arith.constant 0 : i32
    %0 = arith.cmpi eq, %arg1, %c0_i32 : i32
    %1 = arith.extui %0 : i1 to i32
    %c0_i32_0 = arith.constant 0 : i32
    %2 = arith.cmpi ne, %1, %c0_i32_0 : i32
    scf.if %2 {
      %cst_10 = arith.constant 0.000000e+00 : f32
      %20 = vector.broadcast %cst_10 : f32 to vector<8x128xf32>
      %c0_11 = arith.constant 0 : index
      %c0_12 = arith.constant 0 : index
      %21 = vector.load %arg4[%c0_11, %c0_12] : memref<8x128xf32, #tpu.memory_space<vmem>>, vector<8x128xf32>
      tpu.vector_store %arg4[%c0_11, %c0_12], %20 {strides = array<i32>} : memref<8x128xf32, #tpu.memory_space<vmem>>, vector<8x128xf32>,
    } else {
    }
    %c0 = arith.constant 0 : index
    %c0_1 = arith.constant 0 : index
    %3 = vector.load %arg2[%c0, %c0_1] : memref<16x128xf32, #tpu.memory_space<vmem>>, vector<16x128xf32>
    %c0_2 = arith.constant 0 : index
    %c0_3 = arith.constant 0 : index
    %4 = vector.load %arg3[%c0_2, %c0_3] : memref<16x128xf32, #tpu.memory_space<vmem>>, vector<16x128xf32>
    %cst = arith.constant 0.000000e+00 : f32
    %5 = vector.broadcast %cst : f32 to vector<16x128xf32>
    %6 = arith.maximumf %3, %5 : vector<16x128xf32>
    %7 = arith.mulf %3, %4 : vector<16x128xf32>
    %8 = arith.subf %6, %7 : vector<16x128xf32>
    %9 = math.absf %3 : vector<16x128xf32>
    %cst_4 = arith.constant 0.000000e+00 : f32
    %10 = vector.broadcast %cst_4 : f32 to vector<16x128xf32>
    %11 = arith.subf %10, %9 : vector<16x128xf32>
    %12 = math.exp %11 : vector<16x128xf32>
    %13 = math.log1p %12 : vector<16x128xf32>
    %14 = arith.addf %8, %13 : vector<16x128xf32>
    %c0_5 = arith.constant 0 : index
    %c0_6 = arith.constant 0 : index
    %15 = vector.load %arg4[%c0_5, %c0_6] : memref<8x128xf32, #tpu.memory_space<vmem>>, vector<8x128xf32>
    %16 = vector.shape_cast %14 : vector<16x128xf32> to vector<2x8x128xf32>
    %cst_7 = arith.constant dense<0.000000e+00> : vector<8x128xf32>
    %17 = vector.multi_reduction <add>, %16, %cst_7 [0] : vector<2x8x128xf32> to vector<8x128xf32>
    %18 = arith.addf %15, %17 : vector<8x128xf32>
    %c0_8 = arith.constant 0 : index
    %c0_9 = arith.constant 0 : index
    %19 = vector.load %arg4[%c0_8, %c0_9] : memref<8x128xf32, #tpu.memory_space<vmem>>, vector<8x128xf32>
    tpu.vector_store %arg4[%c0_8, %c0_9], %18 {strides = array<i32>} : memref<8x128xf32, #tpu.memory_space<vmem>>, vector<8x128xf32>,
    return
  }
  func.func @transform_0(%arg0: i32, %arg1: i32) -> (i32, i32) {
    %c1_i32 = arith.constant 1 : i32
    %0 = arith.muli %arg0, %c1_i32 : i32
    %1 = arith.addi %0, %arg1 : i32
    %c0_i32 = arith.constant 0 : i32
    %2 = arith.minsi %1, %c0_i32 : i32
    %c0_i32_0 = arith.constant 0 : i32
    %c0_i32_1 = arith.constant 0 : i32
    return %2, %c0_i32_0 : i32, i32
  }
  func.func @transform_1(%arg0: i32, %arg1: i32) -> (i32, i32) {
    %c1_i32 = arith.constant 1 : i32
    %0 = arith.muli %arg0, %c1_i32 : i32
    %1 = arith.addi %0, %arg1 : i32
    %c0_i32 = arith.constant 0 : i32
    %2 = arith.minsi %1, %c0_i32 : i32
    %c0_i32_0 = arith.constant 0 : i32
    %c0_i32_1 = arith.constant 0 : i32
    return %2, %c0_i32_0 : i32, i32
  }
  func.func @transform_2(%arg0: i32, %arg1: i32) -> (i32, i32) {
    %c0_i32 = arith.constant 0 : i32
    %c0_i32_0 = arith.constant 0 : i32
    return %arg0, %c0_i32 : i32, i32
  }
}

</mosaic_0001>

<llo_original>
// kernel: tpu_custom_call.1
$region0: #{tpu_custom_call.1}
  #allocation0 [shape = 'u32[]', space=smem, size = 0x4, offset = 0x4, fixed_abs, tag = 'smem constant byte address 0x4 - core index']
  #allocation1 [shape = 'u32[72,128]{1,0:T(1,128)}', space=vmem, size = 0x9000, scoped, tag = 'internal scratch']
  %s0 = inlined_call_operand.hbm [shape: f32[16,128], index: 0, kind: input, shape index: {}]
  %s1 = inlined_call_operand.hbm [shape: f32[16,128], index: 1, kind: input, shape index: {}]
  %s2 = inlined_call_operand.hbm [shape: f32[8,128], index: 2, kind: output, shape index: {}]
  %s3 = sld [smem:[#allocation0]]
  $region30: #{tpu_custom_call.1} parent=0
    _
  %s5 = ssub.s32 1, %s3
  %s6 = scalar_select 0, %s5, %s3
  $region1: #{tpu_custom_call.1} parent=0
    #allocation2 [shape = 'u8[8192]{0}', space=vmem, size = 0x2000, scoped, tag = 'input window, operand 0, single buffered']
    #allocation3 [shape = 's32[1]{0}', space=sflag, size = 0x4, scoped, tag = 'scoped memory for tpu_custom_call.1']
    #allocation4 [shape = 's32[1]{0}', space=sflag, size = 0x4, scoped, tag = 'scoped memory for tpu_custom_call.1']
    #allocation5 [shape = 'u8[8192]{0}', space=vmem, size = 0x2000, scoped, tag = 'input window, operand 1, single buffered']
    #allocation6 [shape = 's32[1]{0}', space=sflag, size = 0x4, scoped, tag = 'scoped memory for tpu_custom_call.1']
    #allocation7 [shape = 'u8[4096]{0}', space=vmem, size = 0x1000, scoped, tag = 'output window, operand 0, single buffered']
    %7 = vsyncpa [#allocation3], 0
    %8 = vsyncpa [#allocation6], 0
    %9 = vsyncpa [#allocation4], 0
    // Predicated region
    $region2: #{tpu_custom_call.1} parent=1 // pred_check
      _
    $region3: #{tpu_custom_call.1} parent=1 // pred_check_branch
      %11 = sbr.rel (0) target = $region5
    $region4: #{tpu_custom_call.1} parent=1 // pred_region
      %s12 = sadd.s32 0, 0
      %p13 = scmp.lt.s32.totalorder %s12, 0
      %s14 = scalar_select %p13, %s12, 0
      %s15 = smul.u32 2, %s14
      %17 = vsyncadd [#allocation3], 0
      %s18 = smul.addr %s15, 8
      %s19 = scalar_lea.hbm %s0, %s18
      %s20 = sshll.u32 %s19, 4
      %s21 = int_to_ptr.hbm [resolvable:$true] %s20
      %s22 = sshll.u32 [#allocation2], 4
      %s23 = int_to_ptr.vmem [resolvable:$true] %s22
      %28 = dma.hbm_to_vmem [thread:$0]  %s21, 256, %s23, [#allocation3], 128, 128, 8
    $region5: #{tpu_custom_call.1} parent=1 // pred_fallthru
      _
    // Predicated region
    $region6: #{tpu_custom_call.1} parent=1 // pred_check
      _
    $region7: #{tpu_custom_call.1} parent=1 // pred_check_branch
      %30 = sbr.rel (0) target = $region9
    $region8: #{tpu_custom_call.1} parent=1 // pred_region
      %s31 = sadd.s32 0, 0
      %p32 = scmp.lt.s32.totalorder %s31, 0
      %s33 = scalar_select %p32, %s31, 0
      %s34 = smul.u32 2, %s33
      %36 = vsyncadd [#allocation6], 0
      %s37 = smul.addr %s34, 8
      %s38 = scalar_lea.hbm %s1, %s37
      %s39 = sshll.u32 %s38, 4
      %s40 = int_to_ptr.hbm [resolvable:$true] %s39
      %s41 = sshll.u32 [#allocation5], 4
      %s42 = int_to_ptr.vmem [resolvable:$true] %s41
      %47 = dma.hbm_to_vmem [thread:$0]  %s40, 256, %s42, [#allocation6], 128, 128, 8
    $region9: #{tpu_custom_call.1} parent=1 // pred_fallthru
      _
    // Predicated region
    $region10: #{tpu_custom_call.1} parent=1 // pred_check
      _
    $region11: #{tpu_custom_call.1} parent=1 // pred_check_branch
      %49 = sbr.rel (0) target = $region13
    $region12: #{tpu_custom_call.1} parent=1 // pred_region
      %51 = dma.done [#allocation3], 256
    $region13: #{tpu_custom_call.1} parent=1 // pred_fallthru
      _
    // Predicated region
    $region14: #{tpu_custom_call.1} parent=1 // pred_check
      _
    $region15: #{tpu_custom_call.1} parent=1 // pred_check_branch
      %53 = sbr.rel (0) target = $region17
    $region16: #{tpu_custom_call.1} parent=1 // pred_region
      %55 = dma.done [#allocation6], 256
    $region17: #{tpu_custom_call.1} parent=1 // pred_fallthru
      _
    %s56 = sadd.s32 0, 0
    %p57 = scmp.lt.s32.totalorder %s56, 0
    %s58 = scalar_select %p57, %s56, 0
    %s59 = smul.u32 2, %s58
    %s60 = sadd.s32 0, 0
    %p61 = scmp.lt.s32.totalorder %s60, 0
    %s62 = scalar_select %p61, %s60, 0
    %s63 = smul.u32 2, %s62
    %p64 = scmp.eq.s32.totalorder 0, 0
    // Predicated region
    $region18: #{tpu_custom_call.1} parent=1 // pred_check
      %p65 = pneg %p64
    $region19: #{tpu_custom_call.1} parent=1 // pred_check_branch
      %67 = sbr.rel (%p65) target = $region21
    $region20: #{tpu_custom_call.1} parent=1 // pred_region
      %68 = vst [vmem:[#allocation7] sm:$0xff] 0.0
    $region21: #{tpu_custom_call.1} parent=1 // pred_fallthru
      _
    %v69 = vld [vmem:[#allocation2] sm:$0xff]
    %v70 = vld [vmem:[#allocation2 + $0x8] sm:$0xff]
    %v71 = vld [vmem:[#allocation5] sm:$0xff]
    %v72 = vld [vmem:[#allocation5 + $0x8] sm:$0xff]
    %v73 = vmax.f32 %v69, 0.0
    %v74 = vmax.f32 %v70, 0.0
    %v75 = vmul.f32 %v69, %v71
    %v76 = vmul.f32 %v70, %v72
    %v77 = vsub.f32 %v73, %v75
    %v78 = vsub.f32 %v74, %v76
    %v79 = vand.u32 2147483647, %v69
    %v80 = vand.u32 2147483647, %v70
    %v81 = vsub.f32 0.0, %v79
    %v82 = vsub.f32 0.0, %v80
    %v83 = vmul.f32 %v81, 1.442695
    %v84 = vpow.pop %v83
    %v85 = vmul.f32 %v82, 1.442695
    %v86 = vpow.pop %v85
    %v87 = vadd.f32 %v84, 1.0
    %v88 = vlog2.pop %v87
    %v89 = vmul.f32 %v88, 0.6931472
    %v90 = vmul.f32 -0.5, %v84
    %v91 = vadd.f32 %v90, 1.0
    %v92 = vmul.f32 %v91, %v84
    %v93 = vand.u32 2147483647, %v84
    %vm94 = vcmp.lt.f32.partialorder %v93, 0.0004427343
    %v95 = vsel %vm94, %v92, %v89
    %v96 = vadd.f32 %v86, 1.0
    %v97 = vlog2.pop %v96
    %v98 = vmul.f32 %v97, 0.6931472
    %v99 = vmul.f32 -0.5, %v86
    %v100 = vadd.f32 %v99, 1.0
    %v101 = vmul.f32 %v100, %v86
    %v102 = vand.u32 2147483647, %v86
    %vm103 = vcmp.lt.f32.partialorder %v102, 0.0004427343
    %v104 = vsel %vm103, %v101, %v98
    %v105 = vadd.f32 %v77, %v95
    %v106 = vadd.f32 %v78, %v104
    %v107 = vld [vmem:[#allocation7] sm:$0xff]
    %v108 = vadd.f32 %v105, %v106
    %v109 = vadd.f32 %v107, %v108
    %110 = vst [vmem:[#allocation7] sm:$0xff] %v109
    // Predicated region
    $region22: #{tpu_custom_call.1} parent=1 // pred_check
      _
    $region23: #{tpu_custom_call.1} parent=1 // pred_check_branch
      %112 = sbr.rel (0) target = $region25
    $region24: #{tpu_custom_call.1} parent=1 // pred_region
      %114 = vsyncadd [#allocation4], 0
      %s116 = sshll.u32 [#allocation7], 4
      %s117 = int_to_ptr.vmem [resolvable:$true] %s116
      %s118 = sshll.u32 %s2, 4
      %s119 = int_to_ptr.hbm [resolvable:$true] %s118
      %121 = dma.vmem_to_hbm [thread:$0]  %s117, 128, %s119, [#allocation4]
    $region25: #{tpu_custom_call.1} parent=1 // pred_fallthru
      _
    // Predicated region
    $region26: #{tpu_custom_call.1} parent=1 // pred_check
      _
    $region27: #{tpu_custom_call.1} parent=1 // pred_check_branch
      %123 = sbr.rel (0) target = $region29
    $region28: #{tpu_custom_call.1} parent=1 // pred_region
      %125 = dma.done [#allocation4], 128
    $region29: #{tpu_custom_call.1} parent=1 // pred_fallthru
      _
    %126 = vsyncpa [#allocation3], 1
    %127 = vsyncpa [#allocation6], 1
    %128 = vsyncpa [#allocation4], 1

</llo_original>
